<compile_context>
chip_gen: v5e
topology: v5e:2x2
jax: 0.10.0
libtpu: 0.0.40
codegen_flags: <defaults>
</compile_context>

<pallas_src>
import functools

import jax
import jax.numpy as jnp
from jax.experimental import pallas as pl
from jax.experimental.pallas import tpu as pltpu


def _round_up(x, m):
    return ((x + m - 1) // m) * m


def _head_kernel(x_ref, wq_ref, wkv_ref, o_ref,
                 *, head_size, bq, b_actual, needs_mask, mm_dtype):
    H = head_size
    i = pl.program_id(0)

    # ---- K/V projection for ALL rows: one (C, 2H)-wide MXU matmul ----------
    # x_ref is the full (b_pad, C) array, resident in VMEM (same block every
    # grid step -> fetched once per core).
    kv = jnp.dot(x_ref[...], wkv_ref[...],
                 preferred_element_type=jnp.float32)          # (b_pad, 2H) f32
    k = kv[:, :H]
    v = kv[:, H:]

    # ---- Q projection for this query block only (scale folded into W_q) ----
    row0 = pl.multiple_of(i * bq, bq)
    xq = x_ref[pl.ds(row0, bq), :]                            # slice of resident x
    q = jnp.dot(xq, wq_ref[...],
                preferred_element_type=jnp.float32)           # (bq, H) f32

    if mm_dtype != jnp.float32:                               # bf16 MXU operands
        q = q.astype(mm_dtype)
        k = k.astype(mm_dtype)
        v = v.astype(mm_dtype)

    # scores: q @ k^T via dot_general (no explicit transpose / XLU vxpose)
    s = jax.lax.dot_general(q, k, (((1,), (1,)), ((), ())),
                            preferred_element_type=jnp.float32)  # (bq, b_pad)

    if needs_mask:  # static Python flag; finite fill avoids any NaN hazard
        col = jax.lax.broadcasted_iota(jnp.int32, s.shape, 1)
        s = jnp.where(col < b_actual, s, -1e30)

    # ---- single-pass softmax (all f32) --------------------------------------
    m = jnp.max(s, axis=-1, keepdims=True)
    p = jnp.exp(s - m)
    l = jnp.sum(p, axis=-1, keepdims=True)

    out = jnp.dot(p.astype(mm_dtype), v,
                  preferred_element_type=jnp.float32)         # (bq, H) f32

    # TODO(synk): Dropout(p=0.2) on the attention weights omitted — module is
    # evaluated in eval/inference mode where dropout is the identity.
    o_ref[...] = (out * pl.reciprocal(l, approx=True)).astype(o_ref.dtype)


def prepare_head_params(wk, wq, wv):
    """One-time parameter prep (NOT per forward call).

    PyTorch nn.Linear weights of shape (head_size, n_embd) -> kernel layout:
      w_q  : (n_embd, head_size)      with the 1/sqrt(head_size) scale folded in
      w_kv : (n_embd, 2*head_size) == [Wk^T | Wv^T]
    """
    head_size = wq.shape[0]
    w_q = jnp.asarray(wq).T * (float(head_size) ** -0.5)
    w_kv = jnp.concatenate([jnp.asarray(wk), jnp.asarray(wv)], axis=0).T
    return w_q, w_kv


def _choose_tiles(B, itemsize, *, target_bq=512, score_budget_bytes=8 << 20):
    """Pick (bq, b_pad, nq): minimal padding, >=2 query blocks for larger B
    (v7x 2-TC sharding), and the f32 score transient kept within budget."""
    m = {1: 32, 2: 16}.get(itemsize, 8)       # sublane packing multiple per dtype
    b_min = _round_up(B, m)
    nq = max(1, -(-b_min // target_bq))
    if b_min >= 256:
        nq = max(nq, 2)                       # keep the parallel axis >= 2 blocks
    while True:
        bq = _round_up(-(-b_min // nq), m)
        b_pad = nq * bq
        if 4 * bq * b_pad <= score_budget_bytes or bq <= m:
            break
        nq += 1
    return bq, b_pad, nq


def _vmem_limit_bytes(b_pad, bq, C, H, in_itemsize, out_itemsize, mm_itemsize):
    est = 2 * in_itemsize * (b_pad * C + C * H + C * 2 * H)   # double-buffered inputs
    est += 2 * out_itemsize * bq * H                          # output blocks
    est += 4 * (b_pad * 2 * H + 2 * bq * H)                   # kv / q / out transients (f32)
    est += 2 * 4 * bq * b_pad                                 # scores + exp transients (f32)
    est += mm_itemsize * bq * b_pad                           # p cast fed to the MXU
    est = 2 * est + (4 << 20)                                 # compiler scratch / spill margin
    try:
        cap = int(pltpu.get_tpu_info().vmem_capacity_bytes)   # per-generation VMEM
    except Exception:
        cap = 64 << 20                                        # v7x physical (most conservative)
    return int(min(max(est, 16 << 20), (3 * cap) // 4))


def head_forward(x, w_q, w_kv, *, block_q=512):
    """x: (B, n_embd); w_q: (n_embd, H) (scale folded); w_kv: (n_embd, 2H).
    Returns (B, H)."""
    B, C = x.shape
    H = w_q.shape[1]
    assert w_kv.shape == (C, 2 * H)

    in_itemsize = jnp.dtype(x.dtype).itemsize
    bq, b_pad, nq = _choose_tiles(B, in_itemsize, target_bq=block_q)
    # TODO(synk): for very large B (resident x / kv / score tile beyond VMEM) a
    # flash-style kv-tiled variant would be needed; out of scope for this
    # module's typical sequence lengths.

    if b_pad != B:
        x = jnp.pad(x, ((0, b_pad - B), (0, 0)))
    needs_mask = b_pad != B

    mm_dtype = jnp.bfloat16 if x.dtype == jnp.bfloat16 else jnp.float32
    mm_itemsize = jnp.dtype(mm_dtype).itemsize

    kernel = functools.partial(
        _head_kernel,
        head_size=H,
        bq=bq,
        b_actual=B,
        needs_mask=needs_mask,
        mm_dtype=mm_dtype,
    )

    vmem_limit = _vmem_limit_bytes(b_pad, bq, C, H,
                                   in_itemsize, in_itemsize, mm_itemsize)

    out = pl.pallas_call(
        kernel,
        out_shape=jax.ShapeDtypeStruct((b_pad, H), x.dtype),
        grid_spec=pltpu.PrefetchScalarGridSpec(
            num_scalar_prefetch=0,
            grid=(nq,),
            in_specs=[
                pl.BlockSpec((b_pad, C), lambda i: (0, 0)),     # x (resident, DMA'd once)
                pl.BlockSpec((C, H), lambda i: (0, 0)),         # W_q (scaled)
                pl.BlockSpec((C, 2 * H), lambda i: (0, 0)),     # [W_k | W_v]
            ],
            out_specs=pl.BlockSpec((bq, H), lambda i: (i, 0)),
        ),
        compiler_params=pltpu.CompilerParams(
            dimension_semantics=("parallel",),
            vmem_limit_bytes=vmem_limit,
        ),
    )(x, w_q, w_kv)

    return out[:B] if b_pad != B else out


def head_forward_from_torch_weights(x, wk, wq, wv, **kw):
    """Convenience wrapper: accepts PyTorch-layout weights (H, C)."""
    w_q, w_kv = prepare_head_params(wk, wq, wv)
    return head_forward(x, w_q, w_kv, **kw)


def head_reference(x, wk, wq, wv):
    k = x @ wk.T
    q = x @ wq.T
    v = x @ wv.T
    wei = (q @ k.T) * (k.shape[-1] ** -0.5)
    wei = jax.nn.softmax(wei, axis=-1)
    return wei @ v


if __name__ == "__main__":
    n_embd, head_size = 32, 16

    key = jax.random.PRNGKey(0)
    kk, kq, kv, kx1, kx2, kx3 = jax.random.split(key, 6)

    bound = 1.0 / (n_embd ** 0.5)
    wk = jax.random.uniform(kk, (head_size, n_embd), jnp.float32, -bound, bound)
    wq = jax.random.uniform(kq, (head_size, n_embd), jnp.float32, -bound, bound)
    wv = jax.random.uniform(kv, (head_size, n_embd), jnp.float32, -bound, bound)

    # One-time parameter prep (fused / transposed / pre-scaled weights).
    w_q, w_kv = prepare_head_params(wk, wq, wv)

    # Case 1: tiny B (single block, no padding).
    # Case 2: B=100 (exercises zero-padding + finite-value column mask).
    # Case 3: B=384 (two query blocks on the "parallel" axis, no padding).
    for B, kx in ((8, kx1), (100, kx2), (384, kx3)):
        x = jax.random.normal(kx, (B, n_embd), dtype=jnp.float32)
        out = jax.block_until_ready(head_forward(x, w_q, w_kv))
        ref = head_reference(x, wk, wq, wv)
        assert out.shape == (B, head_size), f"bad shape for B={B}"
        assert jnp.allclose(out, ref, atol=5e-3, rtol=5e-3), f"mismatch (B={B})"

    print("KERNEL_OK")
</pallas_src>

<mosaic_0001>
module attributes {stable_mosaic.version = 11 : i64} {
  func.func @_head_kernel(%arg0: i32, %arg1: memref<8x32xf32, #tpu.memory_space<vmem>>, %arg2: memref<32x16xf32, #tpu.memory_space<vmem>>, %arg3: memref<32x32xf32, #tpu.memory_space<vmem>>, %arg4: memref<8x16xf32, #tpu.memory_space<vmem>>) attributes {dimension_semantics = [#tpu.dimension_semantics<parallel>], iteration_bounds = array<i64: 1>, scalar_prefetch = 0 : i64, scratch_operands = 0 : i64, tpu.core_type = #tpu.core_type<tc>, window_params = [{pipeline_mode = #tpu.pipeline_mode<synchronous>, transform_indices = @transform_0, window_bounds = array<i64: 8, 32>}, {pipeline_mode = #tpu.pipeline_mode<synchronous>, transform_indices = @transform_1, window_bounds = array<i64: 32, 16>}, {pipeline_mode = #tpu.pipeline_mode<synchronous>, transform_indices = @transform_2, window_bounds = array<i64: 32, 32>}, {transform_indices = @transform_3, window_bounds = array<i64: 8, 16>}]} {
    %c0 = arith.constant 0 : index
    %c0_0 = arith.constant 0 : index
    %0 = vector.load %arg1[%c0, %c0_0] : memref<8x32xf32, #tpu.memory_space<vmem>>, vector<8x32xf32>
    %c0_1 = arith.constant 0 : index
    %c0_2 = arith.constant 0 : index
    %1 = vector.load %arg3[%c0_1, %c0_2] : memref<32x32xf32, #tpu.memory_space<vmem>>, vector<32x32xf32>
    %cst = arith.constant dense<0.000000e+00> : vector<8x32xf32>
    %2 = tpu.matmul %0, %1, %cst {dimension_numbers = #tpu.dot_dimension_numbers<[1], [0], [0], [1], [0, 0, 1, 1], [], []>} : vector<8x32xf32>, vector<32x32xf32>, vector<8x32xf32> -> vector<8x32xf32>
    %3 = vector.extract_strided_slice %2 {offsets = [0, 0], sizes = [8, 16], strides = [1, 1]} : vector<8x32xf32> to vector<8x16xf32>
    %4 = vector.extract_strided_slice %2 {offsets = [0, 16], sizes = [8, 16], strides = [1, 1]} : vector<8x32xf32> to vector<8x16xf32>
    %c8_i32 = arith.constant 8 : i32
    %5 = arith.muli %arg0, %c8_i32 : i32
    %6 = tpu.assume_multiple %5, 8 : i32
    %7 = arith.index_cast %6 : i32 to index
    %c0_3 = arith.constant 0 : index
    %8 = vector.load %arg1[%7, %c0_3] : memref<8x32xf32, #tpu.memory_space<vmem>>, vector<8x32xf32>
    %c0_4 = arith.constant 0 : index
    %c0_5 = arith.constant 0 : index
    %9 = vector.load %arg2[%c0_4, %c0_5] : memref<32x16xf32, #tpu.memory_space<vmem>>, vector<32x16xf32>
    %cst_6 = arith.constant dense<0.000000e+00> : vector<8x16xf32>
    %10 = tpu.matmul %8, %9, %cst_6 {dimension_numbers = #tpu.dot_dimension_numbers<[1], [0], [0], [1], [0, 0, 1, 1], [], []>} : vector<8x32xf32>, vector<32x16xf32>, vector<8x16xf32> -> vector<8x16xf32>
    %cst_7 = arith.constant dense<0.000000e+00> : vector<8x8xf32>
    %11 = tpu.matmul %10, %3, %cst_7 {dimension_numbers = #tpu.dot_dimension_numbers<[1], [1], [0], [0], [0, 0, 1, 0], [], []>} : vector<8x16xf32>, vector<8x16xf32>, vector<8x8xf32> -> vector<8x8xf32>
    %cst_8 = arith.constant dense<0xFF800000> : vector<8xf32>
    %12 = vector.multi_reduction <maximumf>, %11, %cst_8 [1] : vector<8x8xf32> to vector<8xf32>
    %13 = vector.shape_cast %12 : vector<8xf32> to vector<8x1xf32>
    %14 = vector.broadcast %13 : vector<8x1xf32> to vector<8x8xf32>
    %15 = arith.subf %11, %14 : vector<8x8xf32>
    %16 = math.exp %15 : vector<8x8xf32>
    %cst_9 = arith.constant dense<0.000000e+00> : vector<8xf32>
    %17 = vector.multi_reduction <add>, %16, %cst_9 [1] : vector<8x8xf32> to vector<8xf32>
    %18 = vector.shape_cast %17 : vector<8xf32> to vector<8x1xf32>
    %cst_10 = arith.constant dense<0.000000e+00> : vector<8x16xf32>
    %19 = tpu.matmul %16, %4, %cst_10 {dimension_numbers = #tpu.dot_dimension_numbers<[1], [0], [0], [1], [0, 0, 1, 1], [], []>} : vector<8x8xf32>, vector<8x16xf32>, vector<8x16xf32> -> vector<8x16xf32>
    %20 = tpu.reciprocal %18 {approx = true} : vector<8x1xf32> -> vector<8x1xf32>
    %21 = vector.broadcast %20 : vector<8x1xf32> to vector<8x16xf32>
    %22 = arith.mulf %19, %21 : vector<8x16xf32>
    %c0_11 = arith.constant 0 : index
    %c0_12 = arith.constant 0 : index
    %23 = vector.load %arg4[%c0_11, %c0_12] : memref<8x16xf32, #tpu.memory_space<vmem>>, vector<8x16xf32>
    tpu.vector_store %arg4[%c0_11, %c0_12], %22 {strides = array<i32>} : memref<8x16xf32, #tpu.memory_space<vmem>>, vector<8x16xf32>,
    return
  }
  func.func @transform_0(%arg0: i32) -> (i32, i32) {
    %c0_i32 = arith.constant 0 : i32
    %c0_i32_0 = arith.constant 0 : i32
    %c0_i32_1 = arith.constant 0 : i32
    return %c0_i32, %c0_i32_0 : i32, i32
  }
  func.func @transform_1(%arg0: i32) -> (i32, i32) {
    %c0_i32 = arith.constant 0 : i32
    %c0_i32_0 = arith.constant 0 : i32
    %c0_i32_1 = arith.constant 0 : i32
    return %c0_i32, %c0_i32_0 : i32, i32
  }
  func.func @transform_2(%arg0: i32) -> (i32, i32) {
    %c0_i32 = arith.constant 0 : i32
    %c0_i32_0 = arith.constant 0 : i32
    %c0_i32_1 = arith.constant 0 : i32
    return %c0_i32, %c0_i32_0 : i32, i32
  }
  func.func @transform_3(%arg0: i32) -> (i32, i32) {
    %c0_i32 = arith.constant 0 : i32
    %c0_i32_0 = arith.constant 0 : i32
    return %arg0, %c0_i32 : i32, i32
  }
}

</mosaic_0001>

<llo_original>
// kernel: tpu_custom_call.1
$region0: #{tpu_custom_call.1}
  #allocation0 [shape = 'u32[]', space=smem, size = 0x4, offset = 0x4, fixed_abs, tag = 'smem constant byte address 0x4 - core index']
  #allocation1 [shape = 'u32[72,128]{1,0:T(1,128)}', space=vmem, size = 0x9000, scoped, tag = 'internal scratch']
  %s0 = inlined_call_operand.vmem [shape: f32[8,32], index: 0, kind: input, shape index: {}]
  %s1 = inlined_call_operand.vmem [shape: f32[32,16], index: 1, kind: input, shape index: {}]
  %s2 = inlined_call_operand.vmem [shape: f32[32,32], index: 2, kind: input, shape index: {}]
  %s3 = inlined_call_operand.hbm [shape: f32[8,16], index: 3, kind: output, shape index: {}]
  %s4 = sld [smem:[#allocation0]]
  $region22: #{tpu_custom_call.1} parent=0
    _
  %s6 = ssub.s32 1, %s4
  %s7 = scalar_select 0, %s6, %s4
  $region1: #{tpu_custom_call.1} parent=0
    #allocation2 [shape = 'u8[4096]{0}', space=vmem, size = 0x1000, scoped, tag = 'output window, operand 0, single buffered']
    #allocation3 [shape = 's32[1]{0}', space=sflag, size = 0x4, scoped, tag = 'scoped memory for tpu_custom_call.1']
    %8 = vsyncpa [#allocation3], 0
    // Predicated region
    $region2: #{tpu_custom_call.1} parent=1 // pred_check
      _
    $region3: #{tpu_custom_call.1} parent=1 // pred_check_branch
      %10 = sbr.rel (0) target = $region5
    $region4: #{tpu_custom_call.1} parent=1 // pred_region
      _
    $region5: #{tpu_custom_call.1} parent=1 // pred_fallthru
      _
    // Predicated region
    $region6: #{tpu_custom_call.1} parent=1 // pred_check
      _
    $region7: #{tpu_custom_call.1} parent=1 // pred_check_branch
      %12 = sbr.rel (0) target = $region9
    $region8: #{tpu_custom_call.1} parent=1 // pred_region
      _
    $region9: #{tpu_custom_call.1} parent=1 // pred_fallthru
      _
    // Predicated region
    $region10: #{tpu_custom_call.1} parent=1 // pred_check
      _
    $region11: #{tpu_custom_call.1} parent=1 // pred_check_branch
      %14 = sbr.rel (0) target = $region13
    $region12: #{tpu_custom_call.1} parent=1 // pred_region
      _
    $region13: #{tpu_custom_call.1} parent=1 // pred_fallthru
      _
    %v15 = vld [vmem:[%s0] sm:$0xff]
    %v16 = vld [vmem:[%s2] sm:$0xff]
    %v17 = vld [vmem:[%s2 + $0x8] sm:$0xff]
    %v18 = vld [vmem:[%s2 + $0x10] sm:$0xff]
    %v19 = vld [vmem:[%s2 + $0x18] sm:$0xff]
    %vm20 = vcmask 261120
    %v22 = vsel %vm20, %v15, 0
    %24 = vmatpush.msra.mxu0 0.0
    %25 = vmatpush.msra.mxu0 0.0
    %26 = vmatpush.msra.mxu0 0.0
    %27 = vmatpush.msra.mxu0 0.0
    %28 = vmatpush.msra.mxu0 0.0
    %29 = vmatpush.msra.mxu0 0.0
    %30 = vmatpush.msra.mxu0 0.0
    %31 = vmatpush.msra.mxu0 0.0
    %32 = vmatpush.msra.mxu0 0.0
    %33 = vmatpush.msra.mxu0 0.0
    %34 = vmatpush.msra.mxu0 0.0
    %35 = vmatpush.msra.mxu0 0.0
    %36 = vmatpush.msra.mxu0 %v19
    %37 = vmatpush.msra.mxu0 %v18
    %38 = vmatpush.msra.mxu0 %v17
    %39 = vmatpush.msra.mxu0 %v16
    %40 = vmatmul.f32.gmra.mxu0 %v22
    %v41 = vpop.f32.mrf.mxu0
    %v42 = vadd.f32 0.0, %v41
    %43 = vdwg.mxu0
    %s44 = smul.u32 0, 8
    %s45 = scalar_lea.vmem %s0, %s44
    %v46 = vld [vmem:[%s45] sm:$0xff]
    %v47 = vld [vmem:[%s1] sm:$0xff]
    %v48 = vld [vmem:[%s1 + $0x8] sm:$0xff]
    %v49 = vld [vmem:[%s1 + $0x10] sm:$0xff]
    %v50 = vld [vmem:[%s1 + $0x18] sm:$0xff]
    %v52 = vsel %vm20, %v46, 0
    %54 = vmatpush.msra.mxu0 0.0
    %55 = vmatpush.msra.mxu0 0.0
    %56 = vmatpush.msra.mxu0 0.0
    %57 = vmatpush.msra.mxu0 0.0
    %58 = vmatpush.msra.mxu0 0.0
    %59 = vmatpush.msra.mxu0 0.0
    %60 = vmatpush.msra.mxu0 0.0
    %61 = vmatpush.msra.mxu0 0.0
    %62 = vmatpush.msra.mxu0 0.0
    %63 = vmatpush.msra.mxu0 0.0
    %64 = vmatpush.msra.mxu0 0.0
    %65 = vmatpush.msra.mxu0 0.0
    %66 = vmatpush.msra.mxu0 %v50
    %67 = vmatpush.msra.mxu0 %v49
    %68 = vmatpush.msra.mxu0 %v48
    %69 = vmatpush.msra.mxu0 %v47
    %70 = vmatmul.f32.gmra.mxu0 %v52
    %v71 = vpop.f32.mrf.mxu0
    %v72 = vadd.f32 0.0, %v71
    %73 = vdwg.mxu0
    %vm74 = vcmask 130048
    %v76 = vsel %vm74, %v72, 0
    %v79 = vsel %vm74, %v42, 0
    %81 = vmatpush.xpose.msra.mxu0 0.0
    %82 = vmatpush.xpose.msra.mxu0 0.0
    %83 = vmatpush.xpose.msra.mxu0 0.0
    %84 = vmatpush.xpose.msra.mxu0 0.0
    %85 = vmatpush.xpose.msra.mxu0 0.0
    %86 = vmatpush.xpose.msra.mxu0 0.0
    %87 = vmatpush.xpose.msra.mxu0 0.0
    %88 = vmatpush.xpose.msra.mxu0 0.0
    %89 = vmatpush.xpose.msra.mxu0 0.0
    %90 = vmatpush.xpose.msra.mxu0 0.0
    %91 = vmatpush.xpose.msra.mxu0 0.0
    %92 = vmatpush.xpose.msra.mxu0 0.0
    %93 = vmatpush.xpose.msra.mxu0 0.0
    %94 = vmatpush.xpose.msra.mxu0 0.0
    %95 = vmatpush.xpose.msra.mxu0 0.0
    %96 = vmatpush.xpose.msra.mxu0 %v79
    %97 = vmatmul.f32.gmra.mxu0 %v76
    %v98 = vpop.f32.mrf.mxu0
    %v99 = vadd.f32 0.0, %v98
    %100 = vdwg.mxu0
    %vm101 = vcmask 64512
    %v102 = vsel %vm101, %v99, -inf
    %103 = vmax.xlane.f32.xlu0 %v102
    %v104 = vpop.xlane.xlu0 %103
    %v105 = vsub.f32 %v99, %v104
    %v106 = vmul.f32 %v105, 1.442695
    %v107 = vpow.pop %v106
    %v108 = vsel %vm101, %v107, 0.0
    %109 = vadd.xlane.f32.xlu0 %v108
    %v110 = vpop.xlane.xlu0 %109
    %111 = vrot.lane.b32.xlu0 %v42, 112
    %v112 = vpop.permute.xlu0 %111
    %v115 = vsel %vm101, %v107, 0
    %117 = vmatpush.msra.mxu0 0.0
    %118 = vmatpush.msra.mxu0 0.0
    %119 = vmatpush.msra.mxu0 0.0
    %120 = vmatpush.msra.mxu0 0.0
    %121 = vmatpush.msra.mxu0 0.0
    %122 = vmatpush.msra.mxu0 0.0
    %123 = vmatpush.msra.mxu0 0.0
    %124 = vmatpush.msra.mxu0 0.0
    %125 = vmatpush.msra.mxu0 0.0
    %126 = vmatpush.msra.mxu0 0.0
    %127 = vmatpush.msra.mxu0 0.0
    %128 = vmatpush.msra.mxu0 0.0
    %129 = vmatpush.msra.mxu0 0.0
    %130 = vmatpush.msra.mxu0 0.0
    %131 = vmatpush.msra.mxu0 0.0
    %132 = vmatpush.msra.mxu0 %v112
    %133 = vmatmul.f32.gmra.mxu0 %v115
    %v134 = vpop.f32.mrf.mxu0
    %v135 = vadd.f32 0.0, %v134
    %136 = vdwg.mxu0
    %v137 = vrcp.pop %v110
    %v138 = vmul.f32 %v135, %v137
    %139 = vst.msk [vmem:[#allocation2] sm:$0xff] %vm74, %v138
    // Predicated region
    $region14: #{tpu_custom_call.1} parent=1 // pred_check
      _
    $region15: #{tpu_custom_call.1} parent=1 // pred_check_branch
      %141 = sbr.rel (0) target = $region17
    $region16: #{tpu_custom_call.1} parent=1 // pred_region
      %143 = vsyncadd [#allocation3], 0
      %s145 = sshll.u32 [#allocation2], 4
      %s146 = int_to_ptr.vmem [resolvable:$true] %s145
      %s147 = sshll.u32 %s3, 4
      %s148 = int_to_ptr.hbm [resolvable:$true] %s147
      %150 = dma.vmem_to_hbm [thread:$0]  %s146, 128, %s148, [#allocation3]
    $region17: #{tpu_custom_call.1} parent=1 // pred_fallthru
      _
    // Predicated region
    $region18: #{tpu_custom_call.1} parent=1 // pred_check
      _
    $region19: #{tpu_custom_call.1} parent=1 // pred_check_branch
      %152 = sbr.rel (0) target = $region21
    $region20: #{tpu_custom_call.1} parent=1 // pred_region
      %154 = dma.done [#allocation3], 128
    $region21: #{tpu_custom_call.1} parent=1 // pred_fallthru
      _
    %155 = vsyncpa [#allocation3], 1

</llo_original>
